<compile_context>
chip_gen: v7x
topology: tpu7x:2x2x1
jax: 0.10.0
libtpu: 0.0.40
codegen_flags: <defaults>
</compile_context>

<pallas_src>
import functools

import jax
import jax.numpy as jnp
import numpy as np
from jax.experimental import pallas as pl
from jax.experimental.pallas import tpu as pltpu


def pinn1d_kernel(x_ref, w_in_ref, b_in_ref, w_hid_ref, b_hid_ref,
                  w_out_ref, b_out_ref, o_ref, *,
                  n_hidden_layers, chunk, n_chunks):
    # Weights are tiny (n=10): load once per grid step, reuse for every chunk.
    w_in = w_in_ref[...]                                     # (n, 1)
    b_in = b_in_ref[...]                                     # (n, 1)
    w_hid = [w_hid_ref[i] for i in range(n_hidden_layers)]   # (n, n) each = W_i^T
    b_hid = [b_hid_ref[i] for i in range(n_hidden_layers)]   # (n, 1) each
    w_out = w_out_ref[...]                                   # (n, 1)
    b_out = b_out_ref[0]                                     # scalar from SMEM

    def mlp_chunk(x):
        # x: (1, chunk) — batch on lanes.
        # Input layer is rank-1: VPU broadcast multiply + EUP tanh (no MXU).
        h = jnp.tanh(w_in * x + b_in)                        # (n, chunk)
        # Hidden layers: h <- tanh(W_i^T @ h + b_i)  (MXU + EUP).
        for i in range(n_hidden_layers):
            h = jnp.tanh(
                jnp.dot(w_hid[i], h, preferred_element_type=jnp.float32)
                + b_hid[i]
            )
        # Output layer (M=1, K=10): VPU multiply + sublane (XLU) reduce instead
        # of a serialized tail MXU matmul.
        return jnp.sum(w_out * h, axis=0, keepdims=True) + b_out   # (1, chunk)

    n_pairs = n_chunks // 2
    if n_pairs > 0:
        # Two independent lane chunks per iteration: the LLO scheduler overlaps
        # chunk A's tanh (EUP) with chunk B's matmul (MXU).  The loop (rather
        # than full unroll) bounds live vregs.
        @pl.loop(0, n_pairs)
        def _(p):
            off_a = pl.multiple_of(p * (2 * chunk), chunk)
            off_b = pl.multiple_of(p * (2 * chunk) + chunk, chunk)
            y_a = mlp_chunk(x_ref[:, pl.ds(off_a, chunk)])
            y_b = mlp_chunk(x_ref[:, pl.ds(off_b, chunk)])
            o_ref[:, pl.ds(off_a, chunk)] = y_a.astype(o_ref.dtype)
            o_ref[:, pl.ds(off_b, chunk)] = y_b.astype(o_ref.dtype)

    if n_chunks % 2 == 1:
        off = (n_chunks - 1) * chunk      # static tail chunk
        o_ref[:, pl.ds(off, chunk)] = mlp_chunk(
            x_ref[:, pl.ds(off, chunk)]).astype(o_ref.dtype)


def pinn1d_forward(x, params, *, block_batch=4096, chunk=512):
    """x: (N,) float32.  Returns (N,) float32 — matches PyTorch forward+squeeze."""
    w_in, b_in, w_hid, b_hid, w_out, b_out = params
    N = x.shape[0]
    n = w_in.shape[1]
    n_hidden_layers = w_hid.shape[0]

    def round_up(v, m):
        return ((v + m - 1) // m) * m

    # Large lane-dense batch tile, multiple of `chunk`.  Cap it at half the
    # batch (rounded up) so the grid keeps >=2 parallel steps when possible
    # (both v7x TensorCores busy); VMEM footprint is tiny either way.
    bb = max(chunk, round_up(block_batch, chunk))
    target = max(chunk, round_up((N + 1) // 2, chunk))
    tb = min(bb, target)
    n_blocks = pl.cdiv(N, tb)
    n_pad = n_blocks * tb
    n_chunks = tb // chunk

    x_pad = x if n_pad == N else jnp.pad(x, (0, n_pad - N))
    x2d = x_pad.reshape(1, n_pad)             # batch on the lane axis

    # Transpose weights once outside the kernel to the batch-on-lanes layout.
    w_in_t = jnp.transpose(w_in)              # (n, 1)
    b_in_t = jnp.transpose(b_in)              # (n, 1)
    w_hid_t = jnp.swapaxes(w_hid, 1, 2)       # (L, n, n): W_i^T
    b_hid_t = b_hid[..., None]                # (L, n, 1)
    # w_out stays (n, 1): used as a lane-broadcast column for the VPU/XLU output.
    b_out_s = b_out.reshape((1,))             # SMEM scalar

    kernel = functools.partial(
        pinn1d_kernel, n_hidden_layers=n_hidden_layers,
        chunk=chunk, n_chunks=n_chunks)

    out2d = pl.pallas_call(
        kernel,
        out_shape=jax.ShapeDtypeStruct((1, n_pad), jnp.float32),
        grid_spec=pltpu.PrefetchScalarGridSpec(
            num_scalar_prefetch=0,
            grid=(n_blocks,),
            in_specs=[
                pl.BlockSpec((1, tb), lambda i: (0, i)),                      # x (lane-dense)
                pl.BlockSpec((n, 1), lambda i: (0, 0)),                       # w_in^T
                pl.BlockSpec((n, 1), lambda i: (0, 0)),                       # b_in^T
                pl.BlockSpec((n_hidden_layers, n, n), lambda i: (0, 0, 0)),   # w_hid^T stack
                pl.BlockSpec((n_hidden_layers, n, 1), lambda i: (0, 0, 0)),   # b_hid stack
                pl.BlockSpec((n, 1), lambda i: (0, 0)),                       # w_out column
                pl.BlockSpec(memory_space=pltpu.MemorySpace.SMEM),            # b_out scalar
            ],
            out_specs=pl.BlockSpec((1, tb), lambda i: (0, i)),                # lane-dense out
        ),
        compiler_params=pltpu.CompilerParams(
            dimension_semantics=("parallel",),    # >=2 grid steps -> both TCs on v7x
        ),
    )(x2d, w_in_t, b_in_t, w_hid_t, b_hid_t, w_out, b_out_s)

    return out2d.reshape(n_pad)[:N]   # .squeeze(), drop tail padding


def init_params(key, neurons=10, layers=5):
    """Deterministic init mimicking nn.Linear default (U[-1/sqrt(fan_in), +])."""
    n, nl = neurons, layers
    n_hidden = nl - 2
    keys = jax.random.split(key, 6)

    def unif(k, shape, fan_in):
        bound = 1.0 / np.sqrt(fan_in)
        return jax.random.uniform(k, shape, jnp.float32, -bound, bound)

    w_in = unif(keys[0], (1, n), 1)
    b_in = unif(keys[1], (1, n), 1)
    w_hid = unif(keys[2], (n_hidden, n, n), n)
    b_hid = unif(keys[3], (n_hidden, n), n)
    w_out = unif(keys[4], (n, 1), n)
    b_out = unif(keys[5], (1, 1), n)
    return (w_in, b_in, w_hid, b_hid, w_out, b_out)


def pinn1d_reference(x, params):
    """Pure-JAX reference of the same forward pass (PyTorch layout)."""
    w_in, b_in, w_hid, b_hid, w_out, b_out = params
    h = jnp.tanh(x[:, None] @ w_in + b_in)
    for i in range(w_hid.shape[0]):
        h = jnp.tanh(h @ w_hid[i] + b_hid[i][None, :])
    return (h @ w_out + b_out).reshape(-1)


if __name__ == "__main__":
    key = jax.random.PRNGKey(0)
    k_param, k_x = jax.random.split(key)

    neurons, layers = 10, 5
    params = init_params(k_param, neurons=neurons, layers=layers)

    # Case 1: two lane-dense blocks of 512 (single-chunk / tail path per block).
    N = 1024
    x = jax.random.uniform(k_x, (N,), jnp.float32, -1.0, 1.0)
    out = jax.block_until_ready(pinn1d_forward(x, params))
    np.testing.assert_allclose(np.asarray(out), np.asarray(pinn1d_reference(x, params)),
                               rtol=1e-5, atol=1e-5)

    # Case 2: large batch -> 2 blocks of 2048, exercising the paired-chunk loop.
    x_big = jax.random.uniform(jax.random.PRNGKey(3), (4096,), jnp.float32, -1.0, 1.0)
    out_big = jax.block_until_ready(pinn1d_forward(x_big, params))
    np.testing.assert_allclose(np.asarray(out_big),
                               np.asarray(pinn1d_reference(x_big, params)),
                               rtol=1e-5, atol=1e-5)

    # Case 3: non-tile-divisible batch (padding path).
    x_odd = jax.random.uniform(jax.random.PRNGKey(7), (300,), jnp.float32, -1.0, 1.0)
    out_odd = jax.block_until_ready(pinn1d_forward(x_odd, params))
    np.testing.assert_allclose(np.asarray(out_odd),
                               np.asarray(pinn1d_reference(x_odd, params)),
                               rtol=1e-5, atol=1e-5)

    print("KERNEL_OK")
</pallas_src>

<mosaic_0001>
module attributes {stable_mosaic.version = 11 : i64} {
  func.func @pinn1d_kernel(%arg0: i32, %arg1: memref<1x512xf32, #tpu.memory_space<vmem>>, %arg2: memref<10x1xf32, #tpu.memory_space<vmem>>, %arg3: memref<10x1xf32, #tpu.memory_space<vmem>>, %arg4: memref<3x10x10xf32, #tpu.memory_space<vmem>>, %arg5: memref<3x10x1xf32, #tpu.memory_space<vmem>>, %arg6: memref<10x1xf32, #tpu.memory_space<vmem>>, %arg7: memref<1xf32, #tpu.memory_space<smem>>, %arg8: memref<1x512xf32, #tpu.memory_space<vmem>>) attributes {dimension_semantics = [#tpu.dimension_semantics<parallel>], iteration_bounds = array<i64: 2>, scalar_prefetch = 0 : i64, scratch_operands = 0 : i64, tpu.core_type = #tpu.core_type<tc>, window_params = [{transform_indices = @transform_0, window_bounds = array<i64: 1, 512>}, {pipeline_mode = #tpu.pipeline_mode<synchronous>, transform_indices = @transform_1, window_bounds = array<i64: 10, 1>}, {pipeline_mode = #tpu.pipeline_mode<synchronous>, transform_indices = @transform_2, window_bounds = array<i64: 10, 1>}, {pipeline_mode = #tpu.pipeline_mode<synchronous>, transform_indices = @transform_3, window_bounds = array<i64: 3, 10, 10>}, {pipeline_mode = #tpu.pipeline_mode<synchronous>, transform_indices = @transform_4, window_bounds = array<i64: 3, 10, 1>}, {pipeline_mode = #tpu.pipeline_mode<synchronous>, transform_indices = @transform_5, window_bounds = array<i64: 10, 1>}, {transform_indices = @transform_6, window_bounds = array<i64: 1>}, {transform_indices = @transform_7, window_bounds = array<i64: 1, 512>}]} {
    %c0 = arith.constant 0 : index
    %c0_0 = arith.constant 0 : index
    %0 = vector.load %arg2[%c0, %c0_0] : memref<10x1xf32, #tpu.memory_space<vmem>>, vector<10x1xf32>
    %c0_1 = arith.constant 0 : index
    %c0_2 = arith.constant 0 : index
    %1 = vector.load %arg3[%c0_1, %c0_2] : memref<10x1xf32, #tpu.memory_space<vmem>>, vector<10x1xf32>
    %c0_3 = arith.constant 0 : index
    %c0_4 = arith.constant 0 : index
    %c0_5 = arith.constant 0 : index
    %2 = vector.load %arg4[%c0_3, %c0_4, %c0_5] : memref<3x10x10xf32, #tpu.memory_space<vmem>>, vector<1x10x10xf32>
    %3 = vector.shape_cast %2 : vector<1x10x10xf32> to vector<10x10xf32>
    %c1 = arith.constant 1 : index
    %c0_6 = arith.constant 0 : index
    %c0_7 = arith.constant 0 : index
    %4 = vector.load %arg4[%c1, %c0_6, %c0_7] : memref<3x10x10xf32, #tpu.memory_space<vmem>>, vector<1x10x10xf32>
    %5 = vector.shape_cast %4 : vector<1x10x10xf32> to vector<10x10xf32>
    %c2 = arith.constant 2 : index
    %c0_8 = arith.constant 0 : index
    %c0_9 = arith.constant 0 : index
    %6 = vector.load %arg4[%c2, %c0_8, %c0_9] : memref<3x10x10xf32, #tpu.memory_space<vmem>>, vector<1x10x10xf32>
    %7 = vector.shape_cast %6 : vector<1x10x10xf32> to vector<10x10xf32>
    %c0_10 = arith.constant 0 : index
    %c0_11 = arith.constant 0 : index
    %c0_12 = arith.constant 0 : index
    %8 = vector.load %arg5[%c0_10, %c0_11, %c0_12] : memref<3x10x1xf32, #tpu.memory_space<vmem>>, vector<1x10x1xf32>
    %9 = vector.shape_cast %8 : vector<1x10x1xf32> to vector<10x1xf32>
    %c1_13 = arith.constant 1 : index
    %c0_14 = arith.constant 0 : index
    %c0_15 = arith.constant 0 : index
    %10 = vector.load %arg5[%c1_13, %c0_14, %c0_15] : memref<3x10x1xf32, #tpu.memory_space<vmem>>, vector<1x10x1xf32>
    %11 = vector.shape_cast %10 : vector<1x10x1xf32> to vector<10x1xf32>
    %c2_16 = arith.constant 2 : index
    %c0_17 = arith.constant 0 : index
    %c0_18 = arith.constant 0 : index
    %12 = vector.load %arg5[%c2_16, %c0_17, %c0_18] : memref<3x10x1xf32, #tpu.memory_space<vmem>>, vector<1x10x1xf32>
    %13 = vector.shape_cast %12 : vector<1x10x1xf32> to vector<10x1xf32>
    %c0_19 = arith.constant 0 : index
    %c0_20 = arith.constant 0 : index
    %14 = vector.load %arg6[%c0_19, %c0_20] : memref<10x1xf32, #tpu.memory_space<vmem>>, vector<10x1xf32>
    %c0_21 = arith.constant 0 : index
    %15 = memref.load %arg7[%c0_21] : memref<1xf32, #tpu.memory_space<smem>>
    %c0_22 = arith.constant 0 : index
    %c0_23 = arith.constant 0 : index
    %16 = vector.load %arg1[%c0_22, %c0_23] : memref<1x512xf32, #tpu.memory_space<vmem>>, vector<1x512xf32>
    %17 = vector.broadcast %0 : vector<10x1xf32> to vector<10x512xf32>
    %18 = vector.broadcast %16 : vector<1x512xf32> to vector<10x512xf32>
    %19 = arith.mulf %17, %18 : vector<10x512xf32>
    %20 = vector.broadcast %1 : vector<10x1xf32> to vector<10x512xf32>
    %21 = arith.addf %19, %20 : vector<10x512xf32>
    %22 = math.tanh %21 : vector<10x512xf32>
    %cst = arith.constant dense<0.000000e+00> : vector<10x512xf32>
    %23 = tpu.matmul %3, %22, %cst {dimension_numbers = #tpu.dot_dimension_numbers<[1], [0], [0], [1], [0, 0, 1, 1], [], []>} : vector<10x10xf32>, vector<10x512xf32>, vector<10x512xf32> -> vector<10x512xf32>
    %24 = vector.broadcast %9 : vector<10x1xf32> to vector<10x512xf32>
    %25 = arith.addf %23, %24 : vector<10x512xf32>
    %26 = math.tanh %25 : vector<10x512xf32>
    %cst_24 = arith.constant dense<0.000000e+00> : vector<10x512xf32>
    %27 = tpu.matmul %5, %26, %cst_24 {dimension_numbers = #tpu.dot_dimension_numbers<[1], [0], [0], [1], [0, 0, 1, 1], [], []>} : vector<10x10xf32>, vector<10x512xf32>, vector<10x512xf32> -> vector<10x512xf32>
    %28 = vector.broadcast %11 : vector<10x1xf32> to vector<10x512xf32>
    %29 = arith.addf %27, %28 : vector<10x512xf32>
    %30 = math.tanh %29 : vector<10x512xf32>
    %cst_25 = arith.constant dense<0.000000e+00> : vector<10x512xf32>
    %31 = tpu.matmul %7, %30, %cst_25 {dimension_numbers = #tpu.dot_dimension_numbers<[1], [0], [0], [1], [0, 0, 1, 1], [], []>} : vector<10x10xf32>, vector<10x512xf32>, vector<10x512xf32> -> vector<10x512xf32>
    %32 = vector.broadcast %13 : vector<10x1xf32> to vector<10x512xf32>
    %33 = arith.addf %31, %32 : vector<10x512xf32>
    %34 = math.tanh %33 : vector<10x512xf32>
    %35 = vector.broadcast %14 : vector<10x1xf32> to vector<10x512xf32>
    %36 = arith.mulf %35, %34 : vector<10x512xf32>
    %cst_26 = arith.constant dense<0.000000e+00> : vector<512xf32>
    %37 = vector.multi_reduction <add>, %36, %cst_26 [0] : vector<10x512xf32> to vector<512xf32>
    %38 = vector.shape_cast %37 : vector<512xf32> to vector<1x512xf32>
    %39 = vector.broadcast %15 : f32 to vector<1x512xf32>
    %40 = arith.addf %38, %39 : vector<1x512xf32>
    %c0_27 = arith.constant 0 : index
    %c0_28 = arith.constant 0 : index
    %41 = vector.load %arg8[%c0_27, %c0_28] : memref<1x512xf32, #tpu.memory_space<vmem>>, vector<1x512xf32>
    tpu.vector_store %arg8[%c0_27, %c0_28], %40 {strides = array<i32>} : memref<1x512xf32, #tpu.memory_space<vmem>>, vector<1x512xf32>,
    return
  }
  func.func @transform_0(%arg0: i32) -> (i32, i32) {
    %c0_i32 = arith.constant 0 : i32
    %c0_i32_0 = arith.constant 0 : i32
    return %c0_i32, %arg0 : i32, i32
  }
  func.func @transform_1(%arg0: i32) -> (i32, i32) {
    %c0_i32 = arith.constant 0 : i32
    %c0_i32_0 = arith.constant 0 : i32
    %c0_i32_1 = arith.constant 0 : i32
    return %c0_i32, %c0_i32_0 : i32, i32
  }
  func.func @transform_2(%arg0: i32) -> (i32, i32) {
    %c0_i32 = arith.constant 0 : i32
    %c0_i32_0 = arith.constant 0 : i32
    %c0_i32_1 = arith.constant 0 : i32
    return %c0_i32, %c0_i32_0 : i32, i32
  }
  func.func @transform_3(%arg0: i32) -> (i32, i32, i32) {
    %c0_i32 = arith.constant 0 : i32
    %c0_i32_0 = arith.constant 0 : i32
    %c0_i32_1 = arith.constant 0 : i32
    %c0_i32_2 = arith.constant 0 : i32
    return %c0_i32, %c0_i32_0, %c0_i32_1 : i32, i32, i32
  }
  func.func @transform_4(%arg0: i32) -> (i32, i32, i32) {
    %c0_i32 = arith.constant 0 : i32
    %c0_i32_0 = arith.constant 0 : i32
    %c0_i32_1 = arith.constant 0 : i32
    %c0_i32_2 = arith.constant 0 : i32
    return %c0_i32, %c0_i32_0, %c0_i32_1 : i32, i32, i32
  }
  func.func @transform_5(%arg0: i32) -> (i32, i32) {
    %c0_i32 = arith.constant 0 : i32
    %c0_i32_0 = arith.constant 0 : i32
    %c0_i32_1 = arith.constant 0 : i32
    return %c0_i32, %c0_i32_0 : i32, i32
  }
  func.func @transform_6(%arg0: i32) -> i32 {
    %c0_i32 = arith.constant 0 : i32
    %c0_i32_0 = arith.constant 0 : i32
    return %c0_i32 : i32
  }
  func.func @transform_7(%arg0: i32) -> (i32, i32) {
    %c0_i32 = arith.constant 0 : i32
    %c0_i32_0 = arith.constant 0 : i32
    return %c0_i32, %arg0 : i32, i32
  }
}

</mosaic_0001>

<llo_original>
// kernel: tpu_custom_call.1
$region0: #{tpu_custom_call.1}
  #allocation0 [shape = 'u32[]', space=smem, size = 0x4, offset = 0x4, fixed_abs, tag = 'smem constant byte address 0x4 - core index']
  #allocation1 [shape = 'u32[144,128]{1,0:T(1,128)}', space=vmem, size = 0x12000, scoped, tag = 'internal scratch']
  #allocation2 [shape = 'f32[1]{0:T(128)S(6)}', space=smem, size = 0x200, scoped, tag = 'scoped memory for tpu_custom_call.1']
  %s0 = inlined_call_operand.vmem [shape: f32[1,1024], index: 0, kind: input, shape index: {}]
  %s1 = inlined_call_operand.vmem [shape: f32[10,1], index: 1, kind: input, shape index: {}]
  %s2 = inlined_call_operand.vmem [shape: f32[10,1], index: 2, kind: input, shape index: {}]
  %s3 = inlined_call_operand.vmem [shape: f32[3,10,10], index: 3, kind: input, shape index: {}]
  %s4 = inlined_call_operand.vmem [shape: f32[3,10,1], index: 4, kind: input, shape index: {}]
  %s5 = inlined_call_operand.vmem [shape: f32[10,1], index: 5, kind: input, shape index: {}]
  %s6 = inlined_call_operand.<no memory space> [shape: f32[1], index: 6, kind: input, shape index: {}]
  %s7 = inlined_call_operand.hbm [shape: f32[1,1024], index: 7, kind: output, shape index: {}]
  %s8 = sld [smem:[#allocation0]]
  $region61: #{tpu_custom_call.1} parent=0
    _
  %s10 = ssub.s32 1, %s8
  %s11 = scalar_select 0, %s10, %s8
  %12 = sst [smem:[#allocation2]] %s6
  $region1: #{tpu_custom_call.1} parent=0
    #allocation3 [shape = 'u8[4096]{0}', space=vmem, size = 0x1000, scoped, tag = 'output window, operand 0']
    #allocation4 [shape = 's32[2]{0}', space=sflag, size = 0x8, scoped, tag = 'scoped memory for tpu_custom_call.1']
    %13 = vsyncpa [#allocation4], 0
    %s14 = scalar_lea.sflag [#allocation4], 1
    %15 = vsyncpa %s14, 0
    loop: start=0, step=1, limit=4
    $region2: #{tpu_custom_call.1} parent=1 // loop_pre_header
      _
    $region3: #{tpu_custom_call.1} parent=1 // loop_header
      %s17 = sphi 0, %s21
      %p18 = scmp.ge.s32.totalorder %s17, 4
      %s27 = sphi 0, %s29
      %s30 = sphi 0, %s27
      %s31 = sphi 0, %s30
      %s47 = sphi 0, %s31
      %s51 = sphi 0, %s51
      %s53 = sphi 0, %s51
      %s54 = sphi 0, %s53
      %s68 = sphi 0, %s54
      %s72 = sphi 0, %s72
      %s74 = sphi 0, %s72
      %s75 = sphi 0, %s74
      %s89 = sphi 0, %s75
      %s93 = sphi 0, %s93
      %s95 = sphi 0, %s93
      %s96 = sphi 0, %s95
      %s110 = sphi 0, %s96
      %s114 = sphi 0, %s114
      %s116 = sphi 0, %s114
      %s117 = sphi 0, %s116
      %s131 = sphi 0, %s117
      %s135 = sphi 0, %s135
      %s137 = sphi 0, %s135
      %s138 = sphi 0, %s137
      %s152 = sphi 0, %s138
      %s156 = sphi 0, %s156
      %s158 = sphi 0, %s156
      %s159 = sphi 0, %s158
      %s173 = sphi 0, %s159
      %s179 = sphi 0, %s181
      %s182 = sphi 0, %s179
      %s183 = sphi 0, %s182
      %s199 = sphi 0, %s183
    $region4: #{tpu_custom_call.1} parent=1 // loop_header_branch
      %20 = sbr.rel (%p18) target = $region8
    $region5: #{tpu_custom_call.1} parent=1 // loop_body
      %s22 = ssub.s32 %s17, 1
      %s23 = ssub.s32 %s17, 2
      %s24 = sadd.s32 %s17, 1
      %s25 = ssub.s32 %s17, %s24
      %p26 = scmp.eq.s32.totalorder %s25, 0
      %s28 = sadd.s32 %s27, 1
      %s29 = scalar_select %p26, %s27, %s28
      %p32 = pneg %p26
      %p33 = scmp.eq.s32.totalorder %s17, 1
      %p34 = por %p32, %p33
      %p35 = scmp.ne.s32.totalorder %s27, %s30
      %p36 = scmp.eq.s32.totalorder %s17, 0
      %p37 = por %p35, %p36
      %p38 = scmp.ne.s32.totalorder %s27, %s30
      %p39 = scmp.eq.s32.totalorder %s22, 1
      %p40 = por %p38, %p39
      %p41 = scmp.ne.s32.totalorder %s30, %s31
      %p42 = scmp.eq.s32.totalorder %s22, 0
      %p43 = por %p41, %p42
      %p44 = scmp.ne.s32.totalorder %s30, %s31
      %p45 = scmp.eq.s32.totalorder %s23, 1
      %p46 = por %p44, %p45
      %p48 = scmp.ne.s32.totalorder %s31, %s47
      %p49 = scmp.eq.s32.totalorder %s23, 0
      %p50 = por %p48, %p49
      %s52 = sadd.s32 %s51, 1
      %p55 = scmp.eq.s32.totalorder %s17, 1
      %p56 = scmp.ne.s32.totalorder %s51, %s53
      %p57 = scmp.eq.s32.totalorder %s17, 0
      %p58 = por %p56, %p57
      %p59 = scmp.ne.s32.totalorder %s51, %s53
      %p60 = scmp.eq.s32.totalorder %s22, 1
      %p61 = por %p59, %p60
      %p62 = scmp.ne.s32.totalorder %s53, %s54
      %p63 = scmp.eq.s32.totalorder %s22, 0
      %p64 = por %p62, %p63
      %p65 = scmp.ne.s32.totalorder %s53, %s54
      %p66 = scmp.eq.s32.totalorder %s23, 1
      %p67 = por %p65, %p66
      %p69 = scmp.ne.s32.totalorder %s54, %s68
      %p70 = scmp.eq.s32.totalorder %s23, 0
      %p71 = por %p69, %p70
      %s73 = sadd.s32 %s72, 1
      %p76 = scmp.eq.s32.totalorder %s17, 1
      %p77 = scmp.ne.s32.totalorder %s72, %s74
      %p78 = scmp.eq.s32.totalorder %s17, 0
      %p79 = por %p77, %p78
      %p80 = scmp.ne.s32.totalorder %s72, %s74
      %p81 = scmp.eq.s32.totalorder %s22, 1
      %p82 = por %p80, %p81
      %p83 = scmp.ne.s32.totalorder %s74, %s75
      %p84 = scmp.eq.s32.totalorder %s22, 0
      %p85 = por %p83, %p84
      %p86 = scmp.ne.s32.totalorder %s74, %s75
      %p87 = scmp.eq.s32.totalorder %s23, 1
      %p88 = por %p86, %p87
      %p90 = scmp.ne.s32.totalorder %s75, %s89
      %p91 = scmp.eq.s32.totalorder %s23, 0
      %p92 = por %p90, %p91
      %s94 = sadd.s32 %s93, 1
      %p97 = scmp.eq.s32.totalorder %s17, 1
      %p98 = scmp.ne.s32.totalorder %s93, %s95
      %p99 = scmp.eq.s32.totalorder %s17, 0
      %p100 = por %p98, %p99
      %p101 = scmp.ne.s32.totalorder %s93, %s95
      %p102 = scmp.eq.s32.totalorder %s22, 1
      %p103 = por %p101, %p102
      %p104 = scmp.ne.s32.totalorder %s95, %s96
      %p105 = scmp.eq.s32.totalorder %s22, 0
      %p106 = por %p104, %p105
      %p107 = scmp.ne.s32.totalorder %s95, %s96
      %p108 = scmp.eq.s32.totalorder %s23, 1
      %p109 = por %p107, %p108
      %p111 = scmp.ne.s32.totalorder %s96, %s110
      %p112 = scmp.eq.s32.totalorder %s23, 0
      %p113 = por %p111, %p112
      %s115 = sadd.s32 %s114, 1
      %p118 = scmp.eq.s32.totalorder %s17, 1
      %p119 = scmp.ne.s32.totalorder %s114, %s116
      %p120 = scmp.eq.s32.totalorder %s17, 0
      %p121 = por %p119, %p120
      %p122 = scmp.ne.s32.totalorder %s114, %s116
      %p123 = scmp.eq.s32.totalorder %s22, 1
      %p124 = por %p122, %p123
      %p125 = scmp.ne.s32.totalorder %s116, %s117
      %p126 = scmp.eq.s32.totalorder %s22, 0
      %p127 = por %p125, %p126
      %p128 = scmp.ne.s32.totalorder %s116, %s117
      %p129 = scmp.eq.s32.totalorder %s23, 1
      %p130 = por %p128, %p129
      %p132 = scmp.ne.s32.totalorder %s117, %s131
      %p133 = scmp.eq.s32.totalorder %s23, 0
      %p134 = por %p132, %p133
      %s136 = sadd.s32 %s135, 1
      %p139 = scmp.eq.s32.totalorder %s17, 1
      %p140 = scmp.ne.s32.totalorder %s135, %s137
      %p141 = scmp.eq.s32.totalorder %s17, 0
      %p142 = por %p140, %p141
      %p143 = scmp.ne.s32.totalorder %s135, %s137
      %p144 = scmp.eq.s32.totalorder %s22, 1
      %p145 = por %p143, %p144
      %p146 = scmp.ne.s32.totalorder %s137, %s138
      %p147 = scmp.eq.s32.totalorder %s22, 0
      %p148 = por %p146, %p147
      %p149 = scmp.ne.s32.totalorder %s137, %s138
      %p150 = scmp.eq.s32.totalorder %s23, 1
      %p151 = por %p149, %p150
      %p153 = scmp.ne.s32.totalorder %s138, %s152
      %p154 = scmp.eq.s32.totalorder %s23, 0
      %p155 = por %p153, %p154
      %s157 = sadd.s32 %s156, 1
      %p160 = scmp.eq.s32.totalorder %s17, 1
      %p161 = scmp.ne.s32.totalorder %s156, %s158
      %p162 = scmp.eq.s32.totalorder %s17, 0
      %p163 = por %p161, %p162
      %p164 = scmp.ne.s32.totalorder %s156, %s158
      %p165 = scmp.eq.s32.totalorder %s22, 1
      %p166 = por %p164, %p165
      %p167 = scmp.ne.s32.totalorder %s158, %s159
      %p168 = scmp.eq.s32.totalorder %s22, 0
      %p169 = por %p167, %p168
      %p170 = scmp.ne.s32.totalorder %s158, %s159
      %p171 = scmp.eq.s32.totalorder %s23, 1
      %p172 = por %p170, %p171
      %p174 = scmp.ne.s32.totalorder %s159, %s173
      %p175 = scmp.eq.s32.totalorder %s23, 0
      %p176 = por %p174, %p175
      %s177 = ssub.s32 %s17, %s24
      %p178 = scmp.eq.s32.totalorder %s177, 0
      %s180 = sadd.s32 %s179, 1
      %s181 = scalar_select %p178, %s179, %s180
      %p184 = pneg %p178
      %p185 = scmp.eq.s32.totalorder %s17, 1
      %p186 = por %p184, %p185
      %p187 = scmp.ne.s32.totalorder %s179, %s182
      %p188 = scmp.eq.s32.totalorder %s17, 0
      %p189 = por %p187, %p188
      %p190 = scmp.ne.s32.totalorder %s179, %s182
      %p191 = scmp.eq.s32.totalorder %s22, 1
      %p192 = por %p190, %p191
      %p193 = scmp.ne.s32.totalorder %s182, %s183
      %p194 = scmp.eq.s32.totalorder %s22, 0
      %p195 = por %p193, %p194
      %p196 = scmp.ne.s32.totalorder %s182, %s183
      %p197 = scmp.eq.s32.totalorder %s23, 1
      %p198 = por %p196, %p197
      %p200 = scmp.ne.s32.totalorder %s183, %s199
      %p201 = scmp.eq.s32.totalorder %s23, 0
      %p202 = por %p200, %p201
      %p203 = scmp.le.s32.totalorder 1, %s17
      %p204 = scmp.lt.s32.totalorder %s17, 3
      %p205 = pnand %p203, %p204
      %p206 = pneg %p205
      // Predicated region
      $region9: #{tpu_custom_call.1} parent=5 // pred_check
        _
      $region10: #{tpu_custom_call.1} parent=5 // pred_check_branch
        %208 = sbr.rel (%p205) target = $region12
      $region11: #{tpu_custom_call.1} parent=5 // pred_region
        %s209 = ssub.s32 %s17, 1
        // Predicated region
        $region13: #{tpu_custom_call.1} parent=11 // pred_check
          %p210 = pneg %p64
        $region14: #{tpu_custom_call.1} parent=11 // pred_check_branch
          %212 = sbr.rel (%p210) target = $region16
        $region15: #{tpu_custom_call.1} parent=11 // pred_region
          _
        $region16: #{tpu_custom_call.1} parent=11 // pred_fallthru
          _
        // Predicated region
        $region17: #{tpu_custom_call.1} parent=11 // pred_check
          %p213 = pneg %p85
        $region18: #{tpu_custom_call.1} parent=11 // pred_check_branch
          %215 = sbr.rel (%p213) target = $region20
        $region19: #{tpu_custom_call.1} parent=11 // pred_region
          _
        $region20: #{tpu_custom_call.1} parent=11 // pred_fallthru
          _
        // Predicated region
        $region21: #{tpu_custom_call.1} parent=11 // pred_check
          %p216 = pneg %p106
        $region22: #{tpu_custom_call.1} parent=11 // pred_check_branch
          %218 = sbr.rel (%p216) target = $region24
        $region23: #{tpu_custom_call.1} parent=11 // pred_region
          _
        $region24: #{tpu_custom_call.1} parent=11 // pred_fallthru
          _
        // Predicated region
        $region25: #{tpu_custom_call.1} parent=11 // pred_check
          %p219 = pneg %p127
        $region26: #{tpu_custom_call.1} parent=11 // pred_check_branch
          %221 = sbr.rel (%p219) target = $region28
        $region27: #{tpu_custom_call.1} parent=11 // pred_region
          _
        $region28: #{tpu_custom_call.1} parent=11 // pred_fallthru
          _
        // Predicated region
        $region29: #{tpu_custom_call.1} parent=11 // pred_check
          %p222 = pneg %p148
        $region30: #{tpu_custom_call.1} parent=11 // pred_check_branch
          %224 = sbr.rel (%p222) target = $region32
        $region31: #{tpu_custom_call.1} parent=11 // pred_region
          _
        $region32: #{tpu_custom_call.1} parent=11 // pred_fallthru
          _
        // Predicated region
        $region33: #{tpu_custom_call.1} parent=11 // pred_check
          %p225 = pneg %p169
        $region34: #{tpu_custom_call.1} parent=11 // pred_check_branch
          %227 = sbr.rel (%p225) target = $region36
        $region35: #{tpu_custom_call.1} parent=11 // pred_region
          _
        $region36: #{tpu_custom_call.1} parent=11 // pred_fallthru
          _
      $region12: #{tpu_custom_call.1} parent=5 // pred_fallthru
        _
      %p228 = scmp.lt.s32.totalorder %s17, 2
      // Predicated region
      $region37: #{tpu_custom_call.1} parent=5 // pred_check
        %p229 = pneg %p228
      $region38: #{tpu_custom_call.1} parent=5 // pred_check_branch
        %231 = sbr.rel (%p229) target = $region40
      $region39: #{tpu_custom_call.1} parent=5 // pred_region
        // Predicated region
        $region41: #{tpu_custom_call.1} parent=39 // pred_check
          %p232 = pneg %p37
        $region42: #{tpu_custom_call.1} parent=39 // pred_check_branch
          %234 = sbr.rel (%p232) target = $region44
        $region43: #{tpu_custom_call.1} parent=39 // pred_region
          %s235 = smul.u32 4, %s17
          %p236 = scmp.lt.s32.totalorder %s235, 7
          %s237 = scalar_select %p236, %s235, 7
          %s238 = scalar_lea.vmem %s0, %s237
          %s239 = smul.u32 4, %s17
        $region44: #{tpu_custom_call.1} parent=39 // pred_fallthru
          _
      $region40: #{tpu_custom_call.1} parent=5 // pred_fallthru
        _
      %p240 = scmp.le.s32.totalorder 1, %s17
      %p241 = scmp.lt.s32.totalorder %s17, 3
      %p242 = pnand %p240, %p241
      %p243 = pneg %p242
      // Predicated region
      $region45: #{tpu_custom_call.1} parent=5 // pred_check
        _
      $region46: #{tpu_custom_call.1} parent=5 // pred_check_branch
        %245 = sbr.rel (%p242) target = $region48
      $region47: #{tpu_custom_call.1} parent=5 // pred_region
        %s246 = ssub.s32 %s17, 1
        %s247 = smul.u32 4, %s22
        %p248 = scmp.lt.s32.totalorder %s247, 7
        %s249 = scalar_select %p248, %s247, 7
        %s250 = scalar_lea.vmem %s0, %s249
        %p251 = pneg %p43
        %p252 = pneg %p40
        %p253 = pneg %p64
        %p254 = pneg %p61
        %p255 = pneg %p85
        %p256 = pneg %p82
        %p257 = pneg %p106
        %p258 = pneg %p103
        %p259 = pneg %p127
        %p260 = pneg %p124
        %p261 = pneg %p148
        %p262 = pneg %p145
        %p263 = pneg %p169
        %p264 = pneg %p166
        %p265 = pneg %p195
        %p266 = pneg %p192
        %s267 = sand.u32 %s182, 1
        %s268 = scalar_lea.sflag [#allocation4], %s267
        %s269 = sand.u32 %s182, 1
        %s270 = smul.addr %s269, 4
        %s271 = scalar_lea.vmem [#allocation3], %s270
        %s272 = smul.u32 4, %s22
        %p273 = scmp.lt.s32.totalorder %s272, 7
        %s274 = scalar_select %p273, %s272, 7
        %s275 = scalar_lea.vmem %s0, %s274
        %s276 = smul.u32 4, %s22
        %s277 = smul.u32 4, %s22
        %v278 = vld [vmem:[%s1] sm:$0xff]
        %v279 = vld [vmem:[%s1 + $0x8] sm:$0x3]
        %v280 = vld [vmem:[%s2] sm:$0xff]
        %v281 = vld [vmem:[%s2 + $0x8] sm:$0x3]
        %v282 = vld [vmem:[%s3] sm:$0xff]
        %v283 = vld [vmem:[%s3 + $0x8] sm:$0x3]
        %s284 = scalar_lea.vmem %s3, 16
        %v285 = vld [vmem:[%s284] sm:$0xff]
        %v286 = vld [vmem:[%s284 + $0x8] sm:$0x3]
        %s287 = scalar_lea.vmem %s3, 32
        %v288 = vld [vmem:[%s287] sm:$0xff]
        %v289 = vld [vmem:[%s287 + $0x8] sm:$0x3]
        %v290 = vld [vmem:[%s4] sm:$0xff]
        %v291 = vld [vmem:[%s4 + $0x8] sm:$0x3]
        %s292 = scalar_lea.vmem %s4, 16
        %v293 = vld [vmem:[%s292] sm:$0xff]
        %v294 = vld [vmem:[%s292 + $0x8] sm:$0x3]
        %s295 = scalar_lea.vmem %s4, 32
        %v296 = vld [vmem:[%s295] sm:$0xff]
        %v297 = vld [vmem:[%s295 + $0x8] sm:$0x3]
        %v298 = vld [vmem:[%s5] sm:$0xff]
        %v299 = vld [vmem:[%s5 + $0x8] sm:$0x3]
        %s300 = sld [smem:[#allocation2]]
        %v301 = vld [vmem:[%s275] sm:$0xf]
        %303 = vset.pattern.permute.xlu0 0
        %304 = vperm.xlu0 %303, %v278
        %v305 = vpop.permute.xlu0 %304
        %308 = vset.pattern.permute.xlu0 0
        %309 = vperm.xlu0 %308, %v279
        %v310 = vpop.permute.xlu0 %309
        %v313 = vlaneseq
        %v314 = vshrl.u32 %v313, 7
        %v315 = vsub.s32 0, %v314
        %v316 = vrot.slane %v301, %v315
        %v317 = vlaneseq
        %v318 = vshrl.u32 %v317, 7
        %v319 = vsub.s32 1, %v318
        %v320 = vrot.slane %v301, %v319
        %v321 = vlaneseq
        %v322 = vshrl.u32 %v321, 7
        %v323 = vsub.s32 2, %v322
        %v324 = vrot.slane %v301, %v323
        %v325 = vlaneseq
        %v326 = vshrl.u32 %v325, 7
        %v327 = vsub.s32 3, %v326
        %v328 = vrot.slane %v301, %v327
        %v333 = vmul.f32 %v305, %v316
        %v334 = vmul.f32 %v305, %v320
        %v335 = vmul.f32 %v305, %v324
        %v336 = vmul.f32 %v305, %v328
        %v337 = vmul.f32 %v310, %v316
        %v338 = vmul.f32 %v310, %v320
        %v339 = vmul.f32 %v310, %v324
        %v340 = vmul.f32 %v310, %v328
        %342 = vset.pattern.permute.xlu0 0
        %343 = vperm.xlu0 %342, %v280
        %v344 = vpop.permute.xlu0 %343
        %347 = vset.pattern.permute.xlu0 0
        %348 = vperm.xlu0 %347, %v281
        %v349 = vpop.permute.xlu0 %348
        %v351 = vadd.f32 %v333, %v344
        %v352 = vadd.f32 %v334, %v344
        %v353 = vadd.f32 %v335, %v344
        %v354 = vadd.f32 %v336, %v344
        %v355 = vadd.f32 %v337, %v349
        %v356 = vadd.f32 %v338, %v349
        %v357 = vadd.f32 %v339, %v349
        %v358 = vadd.f32 %v340, %v349
        %v359 = vtanh.pop %v351
        %v360 = vtanh.pop %v352
        %v361 = vtanh.pop %v353
        %v362 = vtanh.pop %v354
        %v363 = vtanh.pop %v355
        %v364 = vtanh.pop %v356
        %v365 = vtanh.pop %v357
        %v366 = vtanh.pop %v358
        %368 = vset.pattern.permute.xlu0 0
        %369 = vperm.xlu0 %368, %v290
        %v370 = vpop.permute.xlu0 %369
        %373 = vset.pattern.permute.xlu0 0
        %374 = vperm.xlu0 %373, %v291
        %v375 = vpop.permute.xlu0 %374
        %vm377 = vcmask 80896
        %v379 = vsel %vm377, %v282, 0
        %v382 = vsel %vm377, %v283, 0
        %vm384 = vcmask 1041408
        %v386 = vsel %vm384, %v363, 0
        %v389 = vsel %vm384, %v364, 0
        %v392 = vsel %vm384, %v365, 0
        %v395 = vsel %vm384, %v366, 0
        %397 = vmatprep.subr.mxu0 %v360
        %398 = vmatpush1.msra.mxu0 %v359
        %399 = vmatprep.subr.mxu0 %v389
        %400 = vmatpush1.msra.mxu0 %v386
        %401 = vmatprep.subr.mxu0 0.0
        %402 = vmatpush1.msra.mxu0 0.0
        %403 = vmatprep.subr.mxu0 0.0
        %404 = vmatpush1.msra.mxu0 0.0
        %405 = vmatprep.subr.mxu0 0.0
        %406 = vmatpush1.msra.mxu0 0.0
        %407 = vmatprep.subr.mxu0 0.0
        %408 = vmatpush1.msra.mxu0 0.0
        %409 = vmatprep.subr.mxu0 0.0
        %410 = vmatpush1.msra.mxu0 0.0
        %411 = vmatprep.subr.mxu0 0.0
        %412 = vmatpush1.msra.mxu0 0.0
        %413 = vmatprep.subr.mxu0 0.0
        %414 = vmatpush1.msra.mxu0 0.0
        %415 = vmatprep.subr.mxu0 0.0
        %416 = vmatpush1.msra.mxu0 0.0
        %417 = vmatprep.subr.mxu0 0.0
        %418 = vmatpush1.msra.mxu0 0.0
        %419 = vmatprep.subr.mxu0 0.0
        %420 = vmatpush1.msra.mxu0 0.0
        %421 = vmatprep.subr.mxu0 0.0
        %422 = vmatpush1.msra.mxu0 0.0
        %423 = vmatprep.subr.mxu0 0.0
        %424 = vmatpush1.msra.mxu0 0.0
        %425 = vmatprep.subr.mxu0 0.0
        %426 = vmatpush1.msra.mxu0 0.0
        %427 = vmatprep.subr.mxu0 0.0
        %428 = vmatpush1.msra.mxu0 0.0
        %429 = vmatprep.subr.mxu0 0.0
        %430 = vmatpush1.msra.mxu0 0.0
        %431 = vmatprep.subr.mxu0 0.0
        %432 = vmatpush1.msra.mxu0 0.0
        %433 = vmatprep.subr.mxu0 0.0
        %434 = vmatpush1.msra.mxu0 0.0
        %435 = vmatprep.subr.mxu0 0.0
        %436 = vmatpush1.msra.mxu0 0.0
        %437 = vmatprep.subr.mxu0 0.0
        %438 = vmatpush1.msra.mxu0 0.0
        %439 = vmatprep.subr.mxu0 0.0
        %440 = vmatpush1.msra.mxu0 0.0
        %441 = vmatprep.subr.mxu0 0.0
        %442 = vmatpush1.msra.mxu0 0.0
        %443 = vmatprep.subr.mxu0 0.0
        %444 = vmatpush1.msra.mxu0 0.0
        %445 = vmatprep.subr.mxu0 0.0
        %446 = vmatpush1.msra.mxu0 0.0
        %447 = vmatprep.subr.mxu0 0.0
        %448 = vmatpush1.msra.mxu0 0.0
        %449 = vmatprep.subr.mxu0 0.0
        %450 = vmatpush1.msra.mxu0 0.0
        %451 = vmatprep.subr.mxu0 0.0
        %452 = vmatpush1.msra.mxu0 0.0
        %453 = vmatprep.subr.mxu0 0.0
        %454 = vmatpush1.msra.mxu0 0.0
        %455 = vmatprep.subr.mxu0 0.0
        %456 = vmatpush1.msra.mxu0 0.0
        %457 = vmatprep.subr.mxu0 0.0
        %458 = vmatpush1.msra.mxu0 0.0
        %459 = vmatprep.subr.mxu0 0.0
        %460 = vmatpush1.msra.mxu0 0.0
        %461 = vmatprep.mubr.f32.mxu0 0.0
        %462 = vmatmul.mubr.f32.gmra.mrb[0].mxu0 %v379
        %v463 = vpop.f32.mrb[0].mxu0
        %v464 = vadd.f32 %v370, %v463
        %v465 = vpop.f32.mrb[0].mxu0
        %v466 = vadd.f32 %v370, %v465
        %467 = vmatprep.mubr.f32.mxu0 0.0
        %468 = vmatmul.mubr.f32.gmra.mrb[0].mxu0 %v382
        %v469 = vpop.f32.mrb[0].mxu0
        %v470 = vadd.f32 %v375, %v469
        %v471 = vpop.f32.mrb[0].mxu0
        %v472 = vadd.f32 %v375, %v471
        %473 = vdwg.mxu0
        %474 = vmatprep.subr.mxu0 %v362
        %475 = vmatpush1.msra.mxu0 %v361
        %476 = vmatprep.subr.mxu0 %v395
        %477 = vmatpush1.msra.mxu0 %v392
        %478 = vmatprep.subr.mxu0 0.0
        %479 = vmatpush1.msra.mxu0 0.0
        %480 = vmatprep.subr.mxu0 0.0
        %481 = vmatpush1.msra.mxu0 0.0
        %482 = vmatprep.subr.mxu0 0.0
        %483 = vmatpush1.msra.mxu0 0.0
        %484 = vmatprep.subr.mxu0 0.0
        %485 = vmatpush1.msra.mxu0 0.0
        %486 = vmatprep.subr.mxu0 0.0
        %487 = vmatpush1.msra.mxu0 0.0
        %488 = vmatprep.subr.mxu0 0.0
        %489 = vmatpush1.msra.mxu0 0.0
        %490 = vmatprep.subr.mxu0 0.0
        %491 = vmatpush1.msra.mxu0 0.0
        %492 = vmatprep.subr.mxu0 0.0
        %493 = vmatpush1.msra.mxu0 0.0
        %494 = vmatprep.subr.mxu0 0.0
        %495 = vmatpush1.msra.mxu0 0.0
        %496 = vmatprep.subr.mxu0 0.0
        %497 = vmatpush1.msra.mxu0 0.0
        %498 = vmatprep.subr.mxu0 0.0
        %499 = vmatpush1.msra.mxu0 0.0
        %500 = vmatprep.subr.mxu0 0.0
        %501 = vmatpush1.msra.mxu0 0.0
        %502 = vmatprep.subr.mxu0 0.0
        %503 = vmatpush1.msra.mxu0 0.0
        %504 = vmatprep.subr.mxu0 0.0
        %505 = vmatpush1.msra.mxu0 0.0
        %506 = vmatprep.subr.mxu0 0.0
        %507 = vmatpush1.msra.mxu0 0.0
        %508 = vmatprep.subr.mxu0 0.0
        %509 = vmatpush1.msra.mxu0 0.0
        %510 = vmatprep.subr.mxu0 0.0
        %511 = vmatpush1.msra.mxu0 0.0
        %512 = vmatprep.subr.mxu0 0.0
        %513 = vmatpush1.msra.mxu0 0.0
        %514 = vmatprep.subr.mxu0 0.0
        %515 = vmatpush1.msra.mxu0 0.0
        %516 = vmatprep.subr.mxu0 0.0
        %517 = vmatpush1.msra.mxu0 0.0
        %518 = vmatprep.subr.mxu0 0.0
        %519 = vmatpush1.msra.mxu0 0.0
        %520 = vmatprep.subr.mxu0 0.0
        %521 = vmatpush1.msra.mxu0 0.0
        %522 = vmatprep.subr.mxu0 0.0
        %523 = vmatpush1.msra.mxu0 0.0
        %524 = vmatprep.subr.mxu0 0.0
        %525 = vmatpush1.msra.mxu0 0.0
        %526 = vmatprep.subr.mxu0 0.0
        %527 = vmatpush1.msra.mxu0 0.0
        %528 = vmatprep.subr.mxu0 0.0
        %529 = vmatpush1.msra.mxu0 0.0
        %530 = vmatprep.subr.mxu0 0.0
        %531 = vmatpush1.msra.mxu0 0.0
        %532 = vmatprep.subr.mxu0 0.0
        %533 = vmatpush1.msra.mxu0 0.0
        %534 = vmatprep.subr.mxu0 0.0
        %535 = vmatpush1.msra.mxu0 0.0
        %536 = vmatprep.subr.mxu0 0.0
        %537 = vmatpush1.msra.mxu0 0.0
        %538 = vmatprep.mubr.f32.mxu0 0.0
        %539 = vmatmul.mubr.f32.gmra.mrb[0].mxu0 %v379
        %v540 = vpop.f32.mrb[0].mxu0
        %v541 = vadd.f32 %v370, %v540
        %v542 = vpop.f32.mrb[0].mxu0
        %v543 = vadd.f32 %v370, %v542
        %544 = vmatprep.mubr.f32.mxu0 0.0
        %545 = vmatmul.mubr.f32.gmra.mrb[0].mxu0 %v382
        %v546 = vpop.f32.mrb[0].mxu0
        %v547 = vadd.f32 %v375, %v546
        %v548 = vpop.f32.mrb[0].mxu0
        %v549 = vadd.f32 %v375, %v548
        %550 = vdwg.mxu0
        %v551 = vtanh.pop %v464
        %v552 = vtanh.pop %v466
        %v553 = vtanh.pop %v541
        %v554 = vtanh.pop %v543
        %v555 = vtanh.pop %v470
        %v556 = vtanh.pop %v472
        %v557 = vtanh.pop %v547
        %v558 = vtanh.pop %v549
        %560 = vset.pattern.permute.xlu0 0
        %561 = vperm.xlu0 %560, %v293
        %v562 = vpop.permute.xlu0 %561
        %565 = vset.pattern.permute.xlu0 0
        %566 = vperm.xlu0 %565, %v294
        %v567 = vpop.permute.xlu0 %566
        %v570 = vsel %vm377, %v285, 0
        %v573 = vsel %vm377, %v286, 0
        %v576 = vsel %vm384, %v555, 0
        %v579 = vsel %vm384, %v556, 0
        %v582 = vsel %vm384, %v557, 0
        %v585 = vsel %vm384, %v558, 0
        %587 = vmatprep.subr.mxu0 %v552
        %588 = vmatpush1.msra.mxu0 %v551
        %589 = vmatprep.subr.mxu0 %v579
        %590 = vmatpush1.msra.mxu0 %v576
        %591 = vmatprep.subr.mxu0 0.0
        %592 = vmatpush1.msra.mxu0 0.0
        %593 = vmatprep.subr.mxu0 0.0
        %594 = vmatpush1.msra.mxu0 0.0
        %595 = vmatprep.subr.mxu0 0.0
        %596 = vmatpush1.msra.mxu0 0.0
        %597 = vmatprep.subr.mxu0 0.0
        %598 = vmatpush1.msra.mxu0 0.0
        %599 = vmatprep.subr.mxu0 0.0
        %600 = vmatpush1.msra.mxu0 0.0
        %601 = vmatprep.subr.mxu0 0.0
        %602 = vmatpush1.msra.mxu0 0.0
        %603 = vmatprep.subr.mxu0 0.0
        %604 = vmatpush1.msra.mxu0 0.0
        %605 = vmatprep.subr.mxu0 0.0
        %606 = vmatpush1.msra.mxu0 0.0
        %607 = vmatprep.subr.mxu0 0.0
        %608 = vmatpush1.msra.mxu0 0.0
        %609 = vmatprep.subr.mxu0 0.0
        %610 = vmatpush1.msra.mxu0 0.0
        %611 = vmatprep.subr.mxu0 0.0
        %612 = vmatpush1.msra.mxu0 0.0
        %613 = vmatprep.subr.mxu0 0.0
        %614 = vmatpush1.msra.mxu0 0.0
        %615 = vmatprep.subr.mxu0 0.0
        %616 = vmatpush1.msra.mxu0 0.0
        %617 = vmatprep.subr.mxu0 0.0
        %618 = vmatpush1.msra.mxu0 0.0
        %619 = vmatprep.subr.mxu0 0.0
        %620 = vmatpush1.msra.mxu0 0.0
        %621 = vmatprep.subr.mxu0 0.0
        %622 = vmatpush1.msra.mxu0 0.0
        %623 = vmatprep.subr.mxu0 0.0
        %624 = vmatpush1.msra.mxu0 0.0
        %625 = vmatprep.subr.mxu0 0.0
        %626 = vmatpush1.msra.mxu0 0.0
        %627 = vmatprep.subr.mxu0 0.0
        %628 = vmatpush1.msra.mxu0 0.0
        %629 = vmatprep.subr.mxu0 0.0
        %630 = vmatpush1.msra.mxu0 0.0
        %631 = vmatprep.subr.mxu0 0.0
        %632 = vmatpush1.msra.mxu0 0.0
        %633 = vmatprep.subr.mxu0 0.0
        %634 = vmatpush1.msra.mxu0 0.0
        %635 = vmatprep.subr.mxu0 0.0
        %636 = vmatpush1.msra.mxu0 0.0
        %637 = vmatprep.subr.mxu0 0.0
        %638 = vmatpush1.msra.mxu0 0.0
        %639 = vmatprep.subr.mxu0 0.0
        %640 = vmatpush1.msra.mxu0 0.0
        %641 = vmatprep.subr.mxu0 0.0
        %642 = vmatpush1.msra.mxu0 0.0
        %643 = vmatprep.subr.mxu0 0.0
        %644 = vmatpush1.msra.mxu0 0.0
        %645 = vmatprep.subr.mxu0 0.0
        %646 = vmatpush1.msra.mxu0 0.0
        %647 = vmatprep.subr.mxu0 0.0
        %648 = vmatpush1.msra.mxu0 0.0
        %649 = vmatprep.subr.mxu0 0.0
        %650 = vmatpush1.msra.mxu0 0.0
        %651 = vmatprep.mubr.f32.mxu0 0.0
        %652 = vmatmul.mubr.f32.gmra.mrb[0].mxu0 %v570
        %v653 = vpop.f32.mrb[0].mxu0
        %v654 = vadd.f32 %v562, %v653
        %v655 = vpop.f32.mrb[0].mxu0
        %v656 = vadd.f32 %v562, %v655
        %657 = vmatprep.mubr.f32.mxu0 0.0
        %658 = vmatmul.mubr.f32.gmra.mrb[0].mxu0 %v573
        %v659 = vpop.f32.mrb[0].mxu0
        %v660 = vadd.f32 %v567, %v659
        %v661 = vpop.f32.mrb[0].mxu0
        %v662 = vadd.f32 %v567, %v661
        %663 = vdwg.mxu0
        %664 = vmatprep.subr.mxu0 %v554
        %665 = vmatpush1.msra.mxu0 %v553
        %666 = vmatprep.subr.mxu0 %v585
        %667 = vmatpush1.msra.mxu0 %v582
        %668 = vmatprep.subr.mxu0 0.0
        %669 = vmatpush1.msra.mxu0 0.0
        %670 = vmatprep.subr.mxu0 0.0
        %671 = vmatpush1.msra.mxu0 0.0
        %672 = vmatprep.subr.mxu0 0.0
        %673 = vmatpush1.msra.mxu0 0.0
        %674 = vmatprep.subr.mxu0 0.0
        %675 = vmatpush1.msra.mxu0 0.0
        %676 = vmatprep.subr.mxu0 0.0
        %677 = vmatpush1.msra.mxu0 0.0
        %678 = vmatprep.subr.mxu0 0.0
        %679 = vmatpush1.msra.mxu0 0.0
        %680 = vmatprep.subr.mxu0 0.0
        %681 = vmatpush1.msra.mxu0 0.0
        %682 = vmatprep.subr.mxu0 0.0
        %683 = vmatpush1.msra.mxu0 0.0
        %684 = vmatprep.subr.mxu0 0.0
        %685 = vmatpush1.msra.mxu0 0.0
        %686 = vmatprep.subr.mxu0 0.0
        %687 = vmatpush1.msra.mxu0 0.0
        %688 = vmatprep.subr.mxu0 0.0
        %689 = vmatpush1.msra.mxu0 0.0
        %690 = vmatprep.subr.mxu0 0.0
        %691 = vmatpush1.msra.mxu0 0.0
        %692 = vmatprep.subr.mxu0 0.0
        %693 = vmatpush1.msra.mxu0 0.0
        %694 = vmatprep.subr.mxu0 0.0
        %695 = vmatpush1.msra.mxu0 0.0
        %696 = vmatprep.subr.mxu0 0.0
        %697 = vmatpush1.msra.mxu0 0.0
        %698 = vmatprep.subr.mxu0 0.0
        %699 = vmatpush1.msra.mxu0 0.0
        %700 = vmatprep.subr.mxu0 0.0
        %701 = vmatpush1.msra.mxu0 0.0
        %702 = vmatprep.subr.mxu0 0.0
        %703 = vmatpush1.msra.mxu0 0.0
        %704 = vmatprep.subr.mxu0 0.0
        %705 = vmatpush1.msra.mxu0 0.0
        %706 = vmatprep.subr.mxu0 0.0
        %707 = vmatpush1.msra.mxu0 0.0
        %708 = vmatprep.subr.mxu0 0.0
        %709 = vmatpush1.msra.mxu0 0.0
        %710 = vmatprep.subr.mxu0 0.0
        %711 = vmatpush1.msra.mxu0 0.0
        %712 = vmatprep.subr.mxu0 0.0
        %713 = vmatpush1.msra.mxu0 0.0
        %714 = vmatprep.subr.mxu0 0.0
        %715 = vmatpush1.msra.mxu0 0.0
        %716 = vmatprep.subr.mxu0 0.0
        %717 = vmatpush1.msra.mxu0 0.0
        %718 = vmatprep.subr.mxu0 0.0
        %719 = vmatpush1.msra.mxu0 0.0
        %720 = vmatprep.subr.mxu0 0.0
        %721 = vmatpush1.msra.mxu0 0.0
        %722 = vmatprep.subr.mxu0 0.0
        %723 = vmatpush1.msra.mxu0 0.0
        %724 = vmatprep.subr.mxu0 0.0
        %725 = vmatpush1.msra.mxu0 0.0
        %726 = vmatprep.subr.mxu0 0.0
        %727 = vmatpush1.msra.mxu0 0.0
        %728 = vmatprep.mubr.f32.mxu0 0.0
        %729 = vmatmul.mubr.f32.gmra.mrb[0].mxu0 %v570
        %v730 = vpop.f32.mrb[0].mxu0
        %v731 = vadd.f32 %v562, %v730
        %v732 = vpop.f32.mrb[0].mxu0
        %v733 = vadd.f32 %v562, %v732
        %734 = vmatprep.mubr.f32.mxu0 0.0
        %735 = vmatmul.mubr.f32.gmra.mrb[0].mxu0 %v573
        %v736 = vpop.f32.mrb[0].mxu0
        %v737 = vadd.f32 %v567, %v736
        %v738 = vpop.f32.mrb[0].mxu0
        %v739 = vadd.f32 %v567, %v738
        %740 = vdwg.mxu0
        %v741 = vtanh.pop %v654
        %v742 = vtanh.pop %v656
        %v743 = vtanh.pop %v731
        %v744 = vtanh.pop %v733
        %v745 = vtanh.pop %v660
        %v746 = vtanh.pop %v662
        %v747 = vtanh.pop %v737
        %v748 = vtanh.pop %v739
        %750 = vset.pattern.permute.xlu0 0
        %751 = vperm.xlu0 %750, %v296
        %v752 = vpop.permute.xlu0 %751
        %755 = vset.pattern.permute.xlu0 0
        %756 = vperm.xlu0 %755, %v297
        %v757 = vpop.permute.xlu0 %756
        %v760 = vsel %vm377, %v288, 0
        %v763 = vsel %vm377, %v289, 0
        %v766 = vsel %vm384, %v745, 0
        %v769 = vsel %vm384, %v746, 0
        %v772 = vsel %vm384, %v747, 0
        %v775 = vsel %vm384, %v748, 0
        %777 = vmatprep.subr.mxu0 %v742
        %778 = vmatpush1.msra.mxu0 %v741
        %779 = vmatprep.subr.mxu0 %v769
        %780 = vmatpush1.msra.mxu0 %v766
        %781 = vmatprep.subr.mxu0 0.0
        %782 = vmatpush1.msra.mxu0 0.0
        %783 = vmatprep.subr.mxu0 0.0
        %784 = vmatpush1.msra.mxu0 0.0
        %785 = vmatprep.subr.mxu0 0.0
        %786 = vmatpush1.msra.mxu0 0.0
        %787 = vmatprep.subr.mxu0 0.0
        %788 = vmatpush1.msra.mxu0 0.0
        %789 = vmatprep.subr.mxu0 0.0
        %790 = vmatpush1.msra.mxu0 0.0
        %791 = vmatprep.subr.mxu0 0.0
        %792 = vmatpush1.msra.mxu0 0.0
        %793 = vmatprep.subr.mxu0 0.0
        %794 = vmatpush1.msra.mxu0 0.0
        %795 = vmatprep.subr.mxu0 0.0
        %796 = vmatpush1.msra.mxu0 0.0
        %797 = vmatprep.subr.mxu0 0.0
        %798 = vmatpush1.msra.mxu0 0.0
        %799 = vmatprep.subr.mxu0 0.0
        %800 = vmatpush1.msra.mxu0 0.0
        %801 = vmatprep.subr.mxu0 0.0
        %802 = vmatpush1.msra.mxu0 0.0
        %803 = vmatprep.subr.mxu0 0.0
        %804 = vmatpush1.msra.mxu0 0.0
        %805 = vmatprep.subr.mxu0 0.0
        %806 = vmatpush1.msra.mxu0 0.0
        %807 = vmatprep.subr.mxu0 0.0
        %808 = vmatpush1.msra.mxu0 0.0
        %809 = vmatprep.subr.mxu0 0.0
        %810 = vmatpush1.msra.mxu0 0.0
        %811 = vmatprep.subr.mxu0 0.0
        %812 = vmatpush1.msra.mxu0 0.0
        %813 = vmatprep.subr.mxu0 0.0
        %814 = vmatpush1.msra.mxu0 0.0
        %815 = vmatprep.subr.mxu0 0.0
        %816 = vmatpush1.msra.mxu0 0.0
        %817 = vmatprep.subr.mxu0 0.0
        %818 = vmatpush1.msra.mxu0 0.0
        %819 = vmatprep.subr.mxu0 0.0
        %820 = vmatpush1.msra.mxu0 0.0
        %821 = vmatprep.subr.mxu0 0.0
        %822 = vmatpush1.msra.mxu0 0.0
        %823 = vmatprep.subr.mxu0 0.0
        %824 = vmatpush1.msra.mxu0 0.0
        %825 = vmatprep.subr.mxu0 0.0
        %826 = vmatpush1.msra.mxu0 0.0
        %827 = vmatprep.subr.mxu0 0.0
        %828 = vmatpush1.msra.mxu0 0.0
        %829 = vmatprep.subr.mxu0 0.0
        %830 = vmatpush1.msra.mxu0 0.0
        %831 = vmatprep.subr.mxu0 0.0
        %832 = vmatpush1.msra.mxu0 0.0
        %833 = vmatprep.subr.mxu0 0.0
        %834 = vmatpush1.msra.mxu0 0.0
        %835 = vmatprep.subr.mxu0 0.0
        %836 = vmatpush1.msra.mxu0 0.0
        %837 = vmatprep.subr.mxu0 0.0
        %838 = vmatpush1.msra.mxu0 0.0
        %839 = vmatprep.subr.mxu0 0.0
        %840 = vmatpush1.msra.mxu0 0.0
        %841 = vmatprep.mubr.f32.mxu0 0.0
        %842 = vmatmul.mubr.f32.gmra.mrb[0].mxu0 %v760
        %v843 = vpop.f32.mrb[0].mxu0
        %v844 = vadd.f32 %v752, %v843
        %v845 = vpop.f32.mrb[0].mxu0
        %v846 = vadd.f32 %v752, %v845
        %847 = vmatprep.mubr.f32.mxu0 0.0
        %848 = vmatmul.mubr.f32.gmra.mrb[0].mxu0 %v763
        %v849 = vpop.f32.mrb[0].mxu0
        %v850 = vadd.f32 %v757, %v849
        %v851 = vpop.f32.mrb[0].mxu0
        %v852 = vadd.f32 %v757, %v851
        %853 = vdwg.mxu0
        %854 = vmatprep.subr.mxu0 %v744
        %855 = vmatpush1.msra.mxu0 %v743
        %856 = vmatprep.subr.mxu0 %v775
        %857 = vmatpush1.msra.mxu0 %v772
        %858 = vmatprep.subr.mxu0 0.0
        %859 = vmatpush1.msra.mxu0 0.0
        %860 = vmatprep.subr.mxu0 0.0
        %861 = vmatpush1.msra.mxu0 0.0
        %862 = vmatprep.subr.mxu0 0.0
        %863 = vmatpush1.msra.mxu0 0.0
        %864 = vmatprep.subr.mxu0 0.0
        %865 = vmatpush1.msra.mxu0 0.0
        %866 = vmatprep.subr.mxu0 0.0
        %867 = vmatpush1.msra.mxu0 0.0
        %868 = vmatprep.subr.mxu0 0.0
        %869 = vmatpush1.msra.mxu0 0.0
        %870 = vmatprep.subr.mxu0 0.0
        %871 = vmatpush1.msra.mxu0 0.0
        %872 = vmatprep.subr.mxu0 0.0
        %873 = vmatpush1.msra.mxu0 0.0
        %874 = vmatprep.subr.mxu0 0.0
        %875 = vmatpush1.msra.mxu0 0.0
        %876 = vmatprep.subr.mxu0 0.0
        %877 = vmatpush1.msra.mxu0 0.0
        %878 = vmatprep.subr.mxu0 0.0
        %879 = vmatpush1.msra.mxu0 0.0
        %880 = vmatprep.subr.mxu0 0.0
        %881 = vmatpush1.msra.mxu0 0.0
        %882 = vmatprep.subr.mxu0 0.0
        %883 = vmatpush1.msra.mxu0 0.0
        %884 = vmatprep.subr.mxu0 0.0
        %885 = vmatpush1.msra.mxu0 0.0
        %886 = vmatprep.subr.mxu0 0.0
        %887 = vmatpush1.msra.mxu0 0.0
        %888 = vmatprep.subr.mxu0 0.0
        %889 = vmatpush1.msra.mxu0 0.0
        %890 = vmatprep.subr.mxu0 0.0
        %891 = vmatpush1.msra.mxu0 0.0
        %892 = vmatprep.subr.mxu0 0.0
        %893 = vmatpush1.msra.mxu0 0.0
        %894 = vmatprep.subr.mxu0 0.0
        %895 = vmatpush1.msra.mxu0 0.0
        %896 = vmatprep.subr.mxu0 0.0
        %897 = vmatpush1.msra.mxu0 0.0
        %898 = vmatprep.subr.mxu0 0.0
        %899 = vmatpush1.msra.mxu0 0.0
        %900 = vmatprep.subr.mxu0 0.0
        %901 = vmatpush1.msra.mxu0 0.0
        %902 = vmatprep.subr.mxu0 0.0
        %903 = vmatpush1.msra.mxu0 0.0
        %904 = vmatprep.subr.mxu0 0.0
        %905 = vmatpush1.msra.mxu0 0.0
        %906 = vmatprep.subr.mxu0 0.0
        %907 = vmatpush1.msra.mxu0 0.0
        %908 = vmatprep.subr.mxu0 0.0
        %909 = vmatpush1.msra.mxu0 0.0
        %910 = vmatprep.subr.mxu0 0.0
        %911 = vmatpush1.msra.mxu0 0.0
        %912 = vmatprep.subr.mxu0 0.0
        %913 = vmatpush1.msra.mxu0 0.0
        %914 = vmatprep.subr.mxu0 0.0
        %915 = vmatpush1.msra.mxu0 0.0
        %916 = vmatprep.subr.mxu0 0.0
        %917 = vmatpush1.msra.mxu0 0.0
        %918 = vmatprep.mubr.f32.mxu0 0.0
        %919 = vmatmul.mubr.f32.gmra.mrb[0].mxu0 %v760
        %v920 = vpop.f32.mrb[0].mxu0
        %v921 = vadd.f32 %v752, %v920
        %v922 = vpop.f32.mrb[0].mxu0
        %v923 = vadd.f32 %v752, %v922
        %924 = vmatprep.mubr.f32.mxu0 0.0
        %925 = vmatmul.mubr.f32.gmra.mrb[0].mxu0 %v763
        %v926 = vpop.f32.mrb[0].mxu0
        %v927 = vadd.f32 %v757, %v926
        %v928 = vpop.f32.mrb[0].mxu0
        %v929 = vadd.f32 %v757, %v928
        %930 = vdwg.mxu0
        %v931 = vtanh.pop %v844
        %v932 = vtanh.pop %v846
        %v933 = vtanh.pop %v921
        %v934 = vtanh.pop %v923
        %v935 = vtanh.pop %v850
        %v936 = vtanh.pop %v852
        %v937 = vtanh.pop %v927
        %v938 = vtanh.pop %v929
        %940 = vset.pattern.permute.xlu0 0
        %941 = vperm.xlu0 %940, %v298
        %v942 = vpop.permute.xlu0 %941
        %945 = vset.pattern.permute.xlu0 0
        %946 = vperm.xlu0 %945, %v299
        %v947 = vpop.permute.xlu0 %946
        %v949 = vmul.f32 %v942, %v931
        %v950 = vmul.f32 %v942, %v932
        %v951 = vmul.f32 %v942, %v933
        %v952 = vmul.f32 %v942, %v934
        %v953 = vmul.f32 %v947, %v935
        %v954 = vmul.f32 %v947, %v936
        %v955 = vmul.f32 %v947, %v937
        %v956 = vmul.f32 %v947, %v938
        %v957 = vsel %vm384, %v953, 0.0
        %v958 = vadd.f32 %v949, %v957
        %v959 = vrot.slane %v958, 4
        %v960 = vadd.f32 %v958, %v959
        %v961 = vrot.slane %v960, 2
        %v962 = vadd.f32 %v960, %v961
        %v963 = vrot.slane %v962, 1
        %v964 = vadd.f32 %v962, %v963
        %v965 = vsel %vm384, %v954, 0.0
        %v966 = vadd.f32 %v950, %v965
        %v967 = vrot.slane %v966, 4
        %v968 = vadd.f32 %v966, %v967
        %v969 = vrot.slane %v968, 2
        %v970 = vadd.f32 %v968, %v969
        %v971 = vrot.slane %v970, 1
        %v972 = vadd.f32 %v970, %v971
        %v973 = vsel %vm384, %v955, 0.0
        %v974 = vadd.f32 %v951, %v973
        %v975 = vrot.slane %v974, 4
        %v976 = vadd.f32 %v974, %v975
        %v977 = vrot.slane %v976, 2
        %v978 = vadd.f32 %v976, %v977
        %v979 = vrot.slane %v978, 1
        %v980 = vadd.f32 %v978, %v979
        %v981 = vsel %vm384, %v956, 0.0
        %v982 = vadd.f32 %v952, %v981
        %v983 = vrot.slane %v982, 4
        %v984 = vadd.f32 %v982, %v983
        %v985 = vrot.slane %v984, 2
        %v986 = vadd.f32 %v984, %v985
        %v987 = vrot.slane %v986, 1
        %v988 = vadd.f32 %v986, %v987
        %v989 = vstv %s300
        %v990 = vadd.f32 %v964, %v989
        %v991 = vadd.f32 %v972, %v989
        %v992 = vadd.f32 %v980, %v989
        %v993 = vadd.f32 %v988, %v989
        %v998 = vcombine.low %v990, %v991
        %v999 = vcombine.low %v992, %v993
        %v1001 = vunpack.c.l.s4 1966171168
        %v1002 = vunpack.c.0.s8 %v1001
        %v1003 = vlaneseq
        %v1004 = vshrl.u32 %v1003, 7
        %v1005 = vsub.s32 %v1002, %v1004
        %v1006 = vrot.slane %v998, %v1005
        %v1008 = vunpack.c.l.s4 1966171168
        %v1009 = vunpack.c.0.s8 %v1008
        %v1010 = vlaneseq
        %v1011 = vshrl.u32 %v1010, 7
        %v1012 = vsub.s32 %v1009, %v1011
        %v1013 = vrot.slane %v999, %v1012
        %v1014 = vcombine.low %v1006, %v1013
        %v1016 = vunpack.c.l.s4 1966171168
        %v1017 = vunpack.c.0.s8 %v1016
        %v1018 = vlaneseq
        %v1019 = vshrl.u32 %v1018, 7
        %v1020 = vsub.s32 %v1017, %v1019
        %v1021 = vrot.slane %v1014, %v1020
        %v1023 = vlaneseq
        %vm1024 = vcmp.ge.s32.totalorder %v1023, 0
        %vm1025 = vcmp.lt.s32.totalorder %v1023, 512
        %vm1026 = vmand %vm1024, %vm1025
        %1027 = vst.msk [vmem:[%s271] sm:$0xf] %vm1026, %v1021
        %s1028 = sand.u32 %s182, 1
        %s1029 = scalar_lea.sflag [#allocation4], %s1028
        %s1030 = sand.u32 %s182, 1
        %s1031 = smul.addr %s1030, 4
        %s1032 = scalar_lea.vmem [#allocation3], %s1031
        // Predicated region
        $region49: #{tpu_custom_call.1} parent=47 // pred_check
          %p1033 = pneg %p192
        $region50: #{tpu_custom_call.1} parent=47 // pred_check_branch
          %1035 = sbr.rel (%p1033) target = $region52
        $region51: #{tpu_custom_call.1} parent=47 // pred_region
          %s1036 = smul.u32 4, %s22
          %s1038 = ssub.s32 64, 64
          %1039 = vsyncadd %s1029, %s1038
          %s1040 = smul.addr %s1036, 16
          %s1041 = scalar_lea.hbm %s7, %s1040
          %s1043 = sshll.u32 %s1032, 4
          %s1044 = int_to_ptr.vmem [resolvable:$true] %s1043
          %1046 = dma.vmem_to_hbm [thread:$0]  %s1044, 64, %s1041, %s1029
        $region52: #{tpu_custom_call.1} parent=47 // pred_fallthru
          _
      $region48: #{tpu_custom_call.1} parent=5 // pred_fallthru
        _
      %p1047 = scmp.le.s32.totalorder 2, %s17
      // Predicated region
      $region53: #{tpu_custom_call.1} parent=5 // pred_check
        %p1048 = pneg %p1047
      $region54: #{tpu_custom_call.1} parent=5 // pred_check_branch
        %1050 = sbr.rel (%p1048) target = $region56
      $region55: #{tpu_custom_call.1} parent=5 // pred_region
        %s1051 = ssub.s32 %s17, 2
        // Predicated region
        $region57: #{tpu_custom_call.1} parent=55 // pred_check
          %p1052 = pneg %p198
        $region58: #{tpu_custom_call.1} parent=55 // pred_check_branch
          %1054 = sbr.rel (%p1052) target = $region60
        $region59: #{tpu_custom_call.1} parent=55 // pred_region
          %s1055 = sand.u32 %s183, 1
          %s1056 = scalar_lea.sflag [#allocation4], %s1055
          %s1057 = sand.u32 %s183, 1
          %s1058 = smul.addr %s1057, 4
          %s1059 = scalar_lea.vmem [#allocation3], %s1058
          %1060 = dma.done %s1056, 64
        $region60: #{tpu_custom_call.1} parent=55 // pred_fallthru
          _
      $region56: #{tpu_custom_call.1} parent=5 // pred_fallthru
        _
    $region6: #{tpu_custom_call.1} parent=1 // loop_footer
      %s21 = sadd.s32 1, %s17
    $region7: #{tpu_custom_call.1} parent=1 // loop_footer_branch
      %16 = sbr.rel target = $region3
    $region8: #{tpu_custom_call.1} parent=1 // loop_exit
      _
    %1061 = vsyncpa [#allocation4], 1
    %s1062 = scalar_lea.sflag [#allocation4], 1
    %1063 = vsyncpa %s1062, 1

</llo_original>
